<compile_context>
chip_gen: v6e
topology: v6e:2x2x1
jax: 0.10.0
libtpu: 0.0.40
codegen_flags: <defaults>
</compile_context>

<pallas_src>
import jax
import jax.numpy as jnp
from jax.experimental import pallas as pl
from jax.experimental.pallas import tpu as pltpu

LANE = 128
SUBLANE = 8
OUT_PAD = 8          # pad the 1-wide output only to a sublane-friendly 8
MAX_TILE_B = 2048    # per-grid-step batch tile cap (tiles are tiny at d_in=32)


def _round_up(n, m):
    return ((n + m - 1) // m) * m


# ---------------------------------------------------------------------------
# Kernel
# ---------------------------------------------------------------------------
def _mlp_kernel(x_ref,
                w1_ref, b1_ref,
                w2_ref, b2_ref,
                w3_ref, b3_ref,
                w4_ref, b4_ref,
                w5_ref, b5_ref,
                out_ref):
    # One batch tile per grid step. Weights/biases stay VMEM-resident
    # (constant index_map); the x/out tiles are auto-pipelined.
    # MXU: bf16 operands, f32 accumulation. Bias add + activation in f32
    # (portable to v5e), activations carried bf16 between layers.
    h = x_ref[...]                                   # (tile_b, d_in) bf16
    for w_ref, b_ref in ((w1_ref, b1_ref), (w2_ref, b2_ref),
                         (w3_ref, b3_ref), (w4_ref, b4_ref)):
        acc = jnp.dot(h, w_ref[...],
                      preferred_element_type=jnp.float32) + b_ref[...]
        # sigmoid(x) == 0.5*tanh(0.5*x)+0.5  -> one EUP op; mul/add on VALU.
        h = (0.5 * jnp.tanh(0.5 * acc) + 0.5).astype(jnp.bfloat16)
        # dropout -> identity (eval mode)
    # layer_out: no activation; keep f32 for an exact final linear.
    out_ref[...] = (jnp.dot(h, w5_ref[...],
                            preferred_element_type=jnp.float32)
                    + b5_ref[...]).astype(out_ref.dtype)


# ---------------------------------------------------------------------------
# Parameters
# ---------------------------------------------------------------------------
def init_params(key, input_size, output_size=1):
    """Deterministic init mimicking torch.nn.Linear default (U(+-1/sqrt(fan_in))).
    Weights stored [in, out] (transposed vs. PyTorch's [out, in]), f32, unpadded."""
    dims = [
        (input_size, 2 * input_size),        # layer_1
        (2 * input_size, 2 * input_size),    # layer_2
        (2 * input_size, input_size),        # layer_3
        (input_size, input_size // 4),       # layer_4
        (input_size // 4, output_size),      # layer_out
    ]
    params = {}
    for i, (fan_in, fan_out) in enumerate(dims, start=1):
        key, kw, kb = jax.random.split(key, 3)
        bound = 1.0 / jnp.sqrt(jnp.float32(fan_in))
        params[f"w{i}"] = jax.random.uniform(
            kw, (fan_in, fan_out), jnp.float32, minval=-bound, maxval=bound)
        params[f"b{i}"] = jax.random.uniform(
            kb, (1, fan_out), jnp.float32, minval=-bound, maxval=bound)
    return params


def prepare_params(params):
    """ONE-TIME padding + bf16 cast (hoisted out of the per-forward path).

    Layer 1's fan_in stays at the native input width (x is not lane-padded);
    hidden fan_outs pad to 128 lanes; the final fan_out pads only to 8 so the
    output writeback stays narrow.  Zero-padding the *input rows* of each
    weight guarantees that the sigmoid(0)=0.5 values living in padded
    activation columns never reach a real output column, so the math is exact
    up to bf16 rounding.  Biases stay f32 (added after f32 accumulation)."""
    padded = {}
    prev_out_pad = None
    for i in range(1, 6):
        w = params[f"w{i}"]
        b = params[f"b{i}"]
        fi, fo = w.shape
        fi_p = fi if i == 1 else prev_out_pad
        fo_p = _round_up(fo, OUT_PAD if i == 5 else LANE)
        wp = jnp.zeros((fi_p, fo_p), jnp.bfloat16).at[:fi, :fo].set(
            w.astype(jnp.bfloat16))
        bp = jnp.zeros((1, fo_p), jnp.float32).at[:, :fo].set(b)
        padded[f"w{i}"] = wp
        padded[f"b{i}"] = bp
        prev_out_pad = fo_p
    return padded


# ---------------------------------------------------------------------------
# Wrapper
# ---------------------------------------------------------------------------
def _choose_batch_tiling(B):
    """Pick (tile_b, b_pad): sublane-aligned, >=2 grid steps when B > 8 (so the
    'parallel' batch axis shards across both v7x TensorCores), capped at
    MAX_TILE_B, shrinking the tile if dead-row padding would exceed ~12.5%."""
    b8 = _round_up(max(B, 1), SUBLANE)
    if b8 > SUBLANE:
        tile_b = min(MAX_TILE_B, _round_up((b8 + 1) // 2, SUBLANE))
    else:
        tile_b = SUBLANE
    b_pad = _round_up(b8, tile_b)
    while tile_b > SUBLANE and (b_pad - b8) * 8 > b_pad:
        tile_b = max(SUBLANE, _round_up(tile_b // 2, SUBLANE))
        b_pad = _round_up(b8, tile_b)
    return tile_b, b_pad


def mlp_forward(x, prepared, output_size=1):
    """x: [B, input_size] f32.  prepared: padded/bf16 dict from prepare_params."""
    B, d_in = x.shape
    assert prepared["w1"].shape[0] == d_in, "prepared params do not match x"
    d_out_p = prepared["w5"].shape[1]

    tile_b, b_pad = _choose_batch_tiling(B)

    # bf16 input at native feature width (no lane padding); only batch rows pad.
    x_p = x.astype(jnp.bfloat16)
    if b_pad != B:
        x_p = jnp.pad(x_p, ((0, b_pad - B), (0, 0)))

    flat_args = [x_p]
    in_specs = [pl.BlockSpec((tile_b, d_in), lambda i: (i, 0))]
    flops = 0
    transcendentals = 0
    bytes_accessed = x_p.size * x_p.dtype.itemsize + b_pad * d_out_p * 4
    for li in range(1, 6):
        w = prepared[f"w{li}"]
        b = prepared[f"b{li}"]
        flat_args += [w, b]
        # Full-extent blocks with constant index_map -> weights stay resident.
        in_specs += [pl.BlockSpec(w.shape, lambda i: (0, 0)),
                     pl.BlockSpec(b.shape, lambda i: (0, 0))]
        flops += 2 * b_pad * w.shape[0] * w.shape[1]
        if li < 5:
            transcendentals += b_pad * w.shape[1]
        bytes_accessed += w.size * w.dtype.itemsize + b.size * 4

    out = pl.pallas_call(
        _mlp_kernel,
        out_shape=jax.ShapeDtypeStruct((b_pad, d_out_p), jnp.float32),
        grid=(b_pad // tile_b,),
        in_specs=in_specs,
        out_specs=pl.BlockSpec((tile_b, d_out_p), lambda i: (i, 0)),
        compiler_params=pltpu.CompilerParams(
            dimension_semantics=("parallel",),
            vmem_limit_bytes=32 * 1024 * 1024),
        cost_estimate=pl.CostEstimate(
            flops=flops,
            transcendentals=transcendentals,
            bytes_accessed=bytes_accessed),
    )(*flat_args)

    return out[:B, :output_size]


# ---------------------------------------------------------------------------
# References
# ---------------------------------------------------------------------------
def mlp_reference_f32(x, params):
    """Pure-JAX f32 reference."""
    h = jax.nn.sigmoid(x @ params["w1"] + params["b1"])
    h = jax.nn.sigmoid(h @ params["w2"] + params["b2"])
    h = jax.nn.sigmoid(h @ params["w3"] + params["b3"])
    h = jax.nn.sigmoid(h @ params["w4"] + params["b4"])
    return h @ params["w5"] + params["b5"]


def mlp_reference_bf16(x, params):
    """Pure-JAX reference mirroring the kernel's bf16-operand / f32-accumulate /
    bf16-carried-activation scheme (same tanh-form sigmoid)."""
    h = x.astype(jnp.bfloat16)
    for i in range(1, 6):
        w = params[f"w{i}"].astype(jnp.bfloat16)
        acc = jnp.dot(h, w, preferred_element_type=jnp.float32) + params[f"b{i}"]
        if i < 5:
            h = (0.5 * jnp.tanh(0.5 * acc) + 0.5).astype(jnp.bfloat16)
        else:
            h = acc
    return h


if __name__ == "__main__":
    key = jax.random.PRNGKey(0)
    key, kx, kp = jax.random.split(key, 3)

    batch = 8
    input_size = 32   # -> hidden 64, 64, 32, 8, out 1
    output_size = 1

    x = jax.random.normal(kx, (batch, input_size), dtype=jnp.float32)
    params = init_params(kp, input_size, output_size)
    prepared = prepare_params(params)   # one-time padding/cast (not per call)

    out = jax.block_until_ready(mlp_forward(x, prepared, output_size))
    assert out.shape == (batch, output_size)

    # Tight check vs. a reference using the identical bf16 scheme.
    ref_bf16 = mlp_reference_bf16(x, params)
    assert jnp.allclose(out, ref_bf16, atol=2e-3, rtol=2e-3), \
        "mismatch vs bf16-emulated reference"

    # Loose check vs. the pure-f32 reference (bf16 operands/activations across
    # a 5-layer sigmoid chain -> ~1e-2 drift is expected and acceptable).
    ref_f32 = mlp_reference_f32(x, params)
    assert jnp.allclose(out, ref_f32, atol=3e-2, rtol=3e-2), \
        "mismatch vs f32 reference"

    print("KERNEL_OK")
</pallas_src>

<mosaic_0001>
module attributes {stable_mosaic.version = 11 : i64} {
  func.func @_mlp_kernel(%arg0: i32, %arg1: memref<8x32xbf16, #tpu.memory_space<vmem>>, %arg2: memref<32x128xbf16, #tpu.memory_space<vmem>>, %arg3: memref<1x128xf32, #tpu.memory_space<vmem>>, %arg4: memref<128x128xbf16, #tpu.memory_space<vmem>>, %arg5: memref<1x128xf32, #tpu.memory_space<vmem>>, %arg6: memref<128x128xbf16, #tpu.memory_space<vmem>>, %arg7: memref<1x128xf32, #tpu.memory_space<vmem>>, %arg8: memref<128x128xbf16, #tpu.memory_space<vmem>>, %arg9: memref<1x128xf32, #tpu.memory_space<vmem>>, %arg10: memref<128x8xbf16, #tpu.memory_space<vmem>>, %arg11: memref<1x8xf32, #tpu.memory_space<vmem>>, %arg12: memref<8x8xf32, #tpu.memory_space<vmem>>) attributes {dimension_semantics = [#tpu.dimension_semantics<parallel>], iteration_bounds = array<i64: 1>, scalar_prefetch = 0 : i64, scratch_operands = 0 : i64, tpu.core_type = #tpu.core_type<tc>, window_params = [{transform_indices = @transform_0, window_bounds = array<i64: 8, 32>}, {pipeline_mode = #tpu.pipeline_mode<synchronous>, transform_indices = @transform_1, window_bounds = array<i64: 32, 128>}, {pipeline_mode = #tpu.pipeline_mode<synchronous>, transform_indices = @transform_2, window_bounds = array<i64: 1, 128>}, {pipeline_mode = #tpu.pipeline_mode<synchronous>, transform_indices = @transform_3, window_bounds = array<i64: 128, 128>}, {pipeline_mode = #tpu.pipeline_mode<synchronous>, transform_indices = @transform_4, window_bounds = array<i64: 1, 128>}, {pipeline_mode = #tpu.pipeline_mode<synchronous>, transform_indices = @transform_5, window_bounds = array<i64: 128, 128>}, {pipeline_mode = #tpu.pipeline_mode<synchronous>, transform_indices = @transform_6, window_bounds = array<i64: 1, 128>}, {pipeline_mode = #tpu.pipeline_mode<synchronous>, transform_indices = @transform_7, window_bounds = array<i64: 128, 128>}, {pipeline_mode = #tpu.pipeline_mode<synchronous>, transform_indices = @transform_8, window_bounds = array<i64: 1, 128>}, {pipeline_mode = #tpu.pipeline_mode<synchronous>, transform_indices = @transform_9, window_bounds = array<i64: 128, 8>}, {pipeline_mode = #tpu.pipeline_mode<synchronous>, transform_indices = @transform_10, window_bounds = array<i64: 1, 8>}, {transform_indices = @transform_11, window_bounds = array<i64: 8, 8>}]} {
    %c0 = arith.constant 0 : index
    %c0_0 = arith.constant 0 : index
    %0 = vector.load %arg1[%c0, %c0_0] : memref<8x32xbf16, #tpu.memory_space<vmem>>, vector<8x32xbf16>
    %c0_1 = arith.constant 0 : index
    %c0_2 = arith.constant 0 : index
    %1 = vector.load %arg2[%c0_1, %c0_2] : memref<32x128xbf16, #tpu.memory_space<vmem>>, vector<32x128xbf16>
    %cst = arith.constant dense<0.000000e+00> : vector<8x128xf32>
    %2 = tpu.matmul %0, %1, %cst {dimension_numbers = #tpu.dot_dimension_numbers<[1], [0], [0], [1], [0, 0, 1, 1], [], []>} : vector<8x32xbf16>, vector<32x128xbf16>, vector<8x128xf32> -> vector<8x128xf32>
    %c0_3 = arith.constant 0 : index
    %c0_4 = arith.constant 0 : index
    %3 = vector.load %arg3[%c0_3, %c0_4] : memref<1x128xf32, #tpu.memory_space<vmem>>, vector<1x128xf32>
    %4 = vector.broadcast %3 : vector<1x128xf32> to vector<8x128xf32>
    %5 = arith.addf %2, %4 : vector<8x128xf32>
    %cst_5 = arith.constant 5.000000e-01 : f32
    %6 = vector.broadcast %cst_5 : f32 to vector<8x128xf32>
    %7 = arith.mulf %6, %5 : vector<8x128xf32>
    %8 = math.tanh %7 : vector<8x128xf32>
    %cst_6 = arith.constant 5.000000e-01 : f32
    %9 = vector.broadcast %cst_6 : f32 to vector<8x128xf32>
    %10 = arith.mulf %9, %8 : vector<8x128xf32>
    %cst_7 = arith.constant 5.000000e-01 : f32
    %11 = vector.broadcast %cst_7 : f32 to vector<8x128xf32>
    %12 = arith.addf %10, %11 : vector<8x128xf32>
    %13 = arith.truncf %12 : vector<8x128xf32> to vector<8x128xbf16>
    %c0_8 = arith.constant 0 : index
    %c0_9 = arith.constant 0 : index
    %14 = vector.load %arg4[%c0_8, %c0_9] : memref<128x128xbf16, #tpu.memory_space<vmem>>, vector<128x128xbf16>
    %cst_10 = arith.constant dense<0.000000e+00> : vector<8x128xf32>
    %15 = tpu.matmul %13, %14, %cst_10 {dimension_numbers = #tpu.dot_dimension_numbers<[1], [0], [0], [1], [0, 0, 1, 1], [], []>} : vector<8x128xbf16>, vector<128x128xbf16>, vector<8x128xf32> -> vector<8x128xf32>
    %c0_11 = arith.constant 0 : index
    %c0_12 = arith.constant 0 : index
    %16 = vector.load %arg5[%c0_11, %c0_12] : memref<1x128xf32, #tpu.memory_space<vmem>>, vector<1x128xf32>
    %17 = vector.broadcast %16 : vector<1x128xf32> to vector<8x128xf32>
    %18 = arith.addf %15, %17 : vector<8x128xf32>
    %cst_13 = arith.constant 5.000000e-01 : f32
    %19 = vector.broadcast %cst_13 : f32 to vector<8x128xf32>
    %20 = arith.mulf %19, %18 : vector<8x128xf32>
    %21 = math.tanh %20 : vector<8x128xf32>
    %cst_14 = arith.constant 5.000000e-01 : f32
    %22 = vector.broadcast %cst_14 : f32 to vector<8x128xf32>
    %23 = arith.mulf %22, %21 : vector<8x128xf32>
    %cst_15 = arith.constant 5.000000e-01 : f32
    %24 = vector.broadcast %cst_15 : f32 to vector<8x128xf32>
    %25 = arith.addf %23, %24 : vector<8x128xf32>
    %26 = arith.truncf %25 : vector<8x128xf32> to vector<8x128xbf16>
    %c0_16 = arith.constant 0 : index
    %c0_17 = arith.constant 0 : index
    %27 = vector.load %arg6[%c0_16, %c0_17] : memref<128x128xbf16, #tpu.memory_space<vmem>>, vector<128x128xbf16>
    %cst_18 = arith.constant dense<0.000000e+00> : vector<8x128xf32>
    %28 = tpu.matmul %26, %27, %cst_18 {dimension_numbers = #tpu.dot_dimension_numbers<[1], [0], [0], [1], [0, 0, 1, 1], [], []>} : vector<8x128xbf16>, vector<128x128xbf16>, vector<8x128xf32> -> vector<8x128xf32>
    %c0_19 = arith.constant 0 : index
    %c0_20 = arith.constant 0 : index
    %29 = vector.load %arg7[%c0_19, %c0_20] : memref<1x128xf32, #tpu.memory_space<vmem>>, vector<1x128xf32>
    %30 = vector.broadcast %29 : vector<1x128xf32> to vector<8x128xf32>
    %31 = arith.addf %28, %30 : vector<8x128xf32>
    %cst_21 = arith.constant 5.000000e-01 : f32
    %32 = vector.broadcast %cst_21 : f32 to vector<8x128xf32>
    %33 = arith.mulf %32, %31 : vector<8x128xf32>
    %34 = math.tanh %33 : vector<8x128xf32>
    %cst_22 = arith.constant 5.000000e-01 : f32
    %35 = vector.broadcast %cst_22 : f32 to vector<8x128xf32>
    %36 = arith.mulf %35, %34 : vector<8x128xf32>
    %cst_23 = arith.constant 5.000000e-01 : f32
    %37 = vector.broadcast %cst_23 : f32 to vector<8x128xf32>
    %38 = arith.addf %36, %37 : vector<8x128xf32>
    %39 = arith.truncf %38 : vector<8x128xf32> to vector<8x128xbf16>
    %c0_24 = arith.constant 0 : index
    %c0_25 = arith.constant 0 : index
    %40 = vector.load %arg8[%c0_24, %c0_25] : memref<128x128xbf16, #tpu.memory_space<vmem>>, vector<128x128xbf16>
    %cst_26 = arith.constant dense<0.000000e+00> : vector<8x128xf32>
    %41 = tpu.matmul %39, %40, %cst_26 {dimension_numbers = #tpu.dot_dimension_numbers<[1], [0], [0], [1], [0, 0, 1, 1], [], []>} : vector<8x128xbf16>, vector<128x128xbf16>, vector<8x128xf32> -> vector<8x128xf32>
    %c0_27 = arith.constant 0 : index
    %c0_28 = arith.constant 0 : index
    %42 = vector.load %arg9[%c0_27, %c0_28] : memref<1x128xf32, #tpu.memory_space<vmem>>, vector<1x128xf32>
    %43 = vector.broadcast %42 : vector<1x128xf32> to vector<8x128xf32>
    %44 = arith.addf %41, %43 : vector<8x128xf32>
    %cst_29 = arith.constant 5.000000e-01 : f32
    %45 = vector.broadcast %cst_29 : f32 to vector<8x128xf32>
    %46 = arith.mulf %45, %44 : vector<8x128xf32>
    %47 = math.tanh %46 : vector<8x128xf32>
    %cst_30 = arith.constant 5.000000e-01 : f32
    %48 = vector.broadcast %cst_30 : f32 to vector<8x128xf32>
    %49 = arith.mulf %48, %47 : vector<8x128xf32>
    %cst_31 = arith.constant 5.000000e-01 : f32
    %50 = vector.broadcast %cst_31 : f32 to vector<8x128xf32>
    %51 = arith.addf %49, %50 : vector<8x128xf32>
    %52 = arith.truncf %51 : vector<8x128xf32> to vector<8x128xbf16>
    %c0_32 = arith.constant 0 : index
    %c0_33 = arith.constant 0 : index
    %53 = vector.load %arg10[%c0_32, %c0_33] : memref<128x8xbf16, #tpu.memory_space<vmem>>, vector<128x8xbf16>
    %cst_34 = arith.constant dense<0.000000e+00> : vector<8x8xf32>
    %54 = tpu.matmul %52, %53, %cst_34 {dimension_numbers = #tpu.dot_dimension_numbers<[1], [0], [0], [1], [0, 0, 1, 1], [], []>} : vector<8x128xbf16>, vector<128x8xbf16>, vector<8x8xf32> -> vector<8x8xf32>
    %c0_35 = arith.constant 0 : index
    %c0_36 = arith.constant 0 : index
    %55 = vector.load %arg11[%c0_35, %c0_36] : memref<1x8xf32, #tpu.memory_space<vmem>>, vector<1x8xf32>
    %56 = vector.broadcast %55 : vector<1x8xf32> to vector<8x8xf32>
    %57 = arith.addf %54, %56 : vector<8x8xf32>
    %c0_37 = arith.constant 0 : index
    %c0_38 = arith.constant 0 : index
    %58 = vector.load %arg12[%c0_37, %c0_38] : memref<8x8xf32, #tpu.memory_space<vmem>>, vector<8x8xf32>
    tpu.vector_store %arg12[%c0_37, %c0_38], %57 {strides = array<i32>} : memref<8x8xf32, #tpu.memory_space<vmem>>, vector<8x8xf32>,
    return
  }
  func.func @transform_0(%arg0: i32) -> (i32, i32) {
    %c0_i32 = arith.constant 0 : i32
    %c0_i32_0 = arith.constant 0 : i32
    return %arg0, %c0_i32 : i32, i32
  }
  func.func @transform_1(%arg0: i32) -> (i32, i32) {
    %c0_i32 = arith.constant 0 : i32
    %c0_i32_0 = arith.constant 0 : i32
    %c0_i32_1 = arith.constant 0 : i32
    return %c0_i32, %c0_i32_0 : i32, i32
  }
  func.func @transform_2(%arg0: i32) -> (i32, i32) {
    %c0_i32 = arith.constant 0 : i32
    %c0_i32_0 = arith.constant 0 : i32
    %c0_i32_1 = arith.constant 0 : i32
    return %c0_i32, %c0_i32_0 : i32, i32
  }
  func.func @transform_3(%arg0: i32) -> (i32, i32) {
    %c0_i32 = arith.constant 0 : i32
    %c0_i32_0 = arith.constant 0 : i32
    %c0_i32_1 = arith.constant 0 : i32
    return %c0_i32, %c0_i32_0 : i32, i32
  }
  func.func @transform_4(%arg0: i32) -> (i32, i32) {
    %c0_i32 = arith.constant 0 : i32
    %c0_i32_0 = arith.constant 0 : i32
    %c0_i32_1 = arith.constant 0 : i32
    return %c0_i32, %c0_i32_0 : i32, i32
  }
  func.func @transform_5(%arg0: i32) -> (i32, i32) {
    %c0_i32 = arith.constant 0 : i32
    %c0_i32_0 = arith.constant 0 : i32
    %c0_i32_1 = arith.constant 0 : i32
    return %c0_i32, %c0_i32_0 : i32, i32
  }
  func.func @transform_6(%arg0: i32) -> (i32, i32) {
    %c0_i32 = arith.constant 0 : i32
    %c0_i32_0 = arith.constant 0 : i32
    %c0_i32_1 = arith.constant 0 : i32
    return %c0_i32, %c0_i32_0 : i32, i32
  }
  func.func @transform_7(%arg0: i32) -> (i32, i32) {
    %c0_i32 = arith.constant 0 : i32
    %c0_i32_0 = arith.constant 0 : i32
    %c0_i32_1 = arith.constant 0 : i32
    return %c0_i32, %c0_i32_0 : i32, i32
  }
  func.func @transform_8(%arg0: i32) -> (i32, i32) {
    %c0_i32 = arith.constant 0 : i32
    %c0_i32_0 = arith.constant 0 : i32
    %c0_i32_1 = arith.constant 0 : i32
    return %c0_i32, %c0_i32_0 : i32, i32
  }
  func.func @transform_9(%arg0: i32) -> (i32, i32) {
    %c0_i32 = arith.constant 0 : i32
    %c0_i32_0 = arith.constant 0 : i32
    %c0_i32_1 = arith.constant 0 : i32
    return %c0_i32, %c0_i32_0 : i32, i32
  }
  func.func @transform_10(%arg0: i32) -> (i32, i32) {
    %c0_i32 = arith.constant 0 : i32
    %c0_i32_0 = arith.constant 0 : i32
    %c0_i32_1 = arith.constant 0 : i32
    return %c0_i32, %c0_i32_0 : i32, i32
  }
  func.func @transform_11(%arg0: i32) -> (i32, i32) {
    %c0_i32 = arith.constant 0 : i32
    %c0_i32_0 = arith.constant 0 : i32
    return %arg0, %c0_i32 : i32, i32
  }
}

</mosaic_0001>

<llo_original>
// kernel: tpu_custom_call.1
$region0: #{tpu_custom_call.1}
  #allocation0 [shape = 'u32[]', space=smem, size = 0x4, offset = 0x4, fixed_abs, tag = 'smem constant byte address 0x4 - core index']
  #allocation1 [shape = 'u32[144,128]{1,0:T(1,128)}', space=vmem, size = 0x12000, scoped, tag = 'internal scratch']
  %s0 = inlined_call_operand.vmem [shape: bf16[8,32], index: 0, kind: input, shape index: {}]
  %s1 = inlined_call_operand.hbm [shape: bf16[32,128], index: 1, kind: input, shape index: {}]
  %s2 = inlined_call_operand.vmem [shape: f32[1,128], index: 2, kind: input, shape index: {}]
  %s3 = inlined_call_operand.vmem [shape: bf16[128,128], index: 3, kind: input, shape index: {}]
  %s4 = inlined_call_operand.vmem [shape: f32[1,128], index: 4, kind: input, shape index: {}]
  %s5 = inlined_call_operand.hbm [shape: bf16[128,128], index: 5, kind: input, shape index: {}]
  %s6 = inlined_call_operand.vmem [shape: f32[1,128], index: 6, kind: input, shape index: {}]
  %s7 = inlined_call_operand.hbm [shape: bf16[128,128], index: 7, kind: input, shape index: {}]
  %s8 = inlined_call_operand.vmem [shape: f32[1,128], index: 8, kind: input, shape index: {}]
  %s9 = inlined_call_operand.vmem [shape: bf16[128,8], index: 9, kind: input, shape index: {}]
  %s10 = inlined_call_operand.vmem [shape: f32[1,8], index: 10, kind: input, shape index: {}]
  %s11 = inlined_call_operand.hbm [shape: f32[8,8], index: 11, kind: output, shape index: {}]
  %s12 = sld [smem:[#allocation0]]
  $region66: #{tpu_custom_call.1} parent=0
    _
  %s14 = ssub.s32 1, %s12
  %s15 = scalar_select 0, %s14, %s12
  $region1: #{tpu_custom_call.1} parent=0
    #allocation2 [shape = 'u8[8192]{0}', space=vmem, size = 0x2000, scoped, tag = 'input window, operand 1, single buffered']
    #allocation3 [shape = 's32[1]{0}', space=sflag, size = 0x4, scoped, tag = 'scoped memory for tpu_custom_call.1']
    #allocation4 [shape = 's32[1]{0}', space=sflag, size = 0x4, scoped, tag = 'scoped memory for tpu_custom_call.1']
    #allocation5 [shape = 'u8[32768]{0}', space=vmem, size = 0x8000, scoped, tag = 'input window, operand 5, single buffered']
    #allocation6 [shape = 's32[1]{0}', space=sflag, size = 0x4, scoped, tag = 'scoped memory for tpu_custom_call.1']
    #allocation7 [shape = 'u8[32768]{0}', space=vmem, size = 0x8000, scoped, tag = 'input window, operand 7, single buffered']
    #allocation8 [shape = 'u8[4096]{0}', space=vmem, size = 0x1000, scoped, tag = 'output window, operand 0, single buffered']
    %16 = vsyncpa [#allocation3], 0
    %17 = vsyncpa [#allocation6], 0
    %18 = vsyncpa [#allocation4], 0
    // Predicated region
    $region2: #{tpu_custom_call.1} parent=1 // pred_check
      _
    $region3: #{tpu_custom_call.1} parent=1 // pred_check_branch
      %20 = sbr.rel (0) target = $region5
    $region4: #{tpu_custom_call.1} parent=1 // pred_region
      _
    $region5: #{tpu_custom_call.1} parent=1 // pred_fallthru
      _
    // Predicated region
    $region6: #{tpu_custom_call.1} parent=1 // pred_check
      _
    $region7: #{tpu_custom_call.1} parent=1 // pred_check_branch
      %22 = sbr.rel (0) target = $region9
    $region8: #{tpu_custom_call.1} parent=1 // pred_region
      %s24 = ssub.s32 256, 256
      %25 = vsyncadd [#allocation3], %s24
      %s26 = sshll.u32 [#allocation2], 4
      %s27 = int_to_ptr.vmem [resolvable:$true] %s26
      %32 = dma.hbm_to_vmem [thread:$0]  %s1, 256, %s27, [#allocation3], 64, 64, 4
    $region9: #{tpu_custom_call.1} parent=1 // pred_fallthru
      _
    // Predicated region
    $region10: #{tpu_custom_call.1} parent=1 // pred_check
      _
    $region11: #{tpu_custom_call.1} parent=1 // pred_check_branch
      %34 = sbr.rel (0) target = $region13
    $region12: #{tpu_custom_call.1} parent=1 // pred_region
      _
    $region13: #{tpu_custom_call.1} parent=1 // pred_fallthru
      _
    // Predicated region
    $region14: #{tpu_custom_call.1} parent=1 // pred_check
      _
    $region15: #{tpu_custom_call.1} parent=1 // pred_check_branch
      %36 = sbr.rel (0) target = $region17
    $region16: #{tpu_custom_call.1} parent=1 // pred_region
      _
    $region17: #{tpu_custom_call.1} parent=1 // pred_fallthru
      _
    // Predicated region
    $region18: #{tpu_custom_call.1} parent=1 // pred_check
      _
    $region19: #{tpu_custom_call.1} parent=1 // pred_check_branch
      %38 = sbr.rel (0) target = $region21
    $region20: #{tpu_custom_call.1} parent=1 // pred_region
      _
    $region21: #{tpu_custom_call.1} parent=1 // pred_fallthru
      _
    // Predicated region
    $region22: #{tpu_custom_call.1} parent=1 // pred_check
      _
    $region23: #{tpu_custom_call.1} parent=1 // pred_check_branch
      %40 = sbr.rel (0) target = $region25
    $region24: #{tpu_custom_call.1} parent=1 // pred_region
      %s42 = ssub.s32 1024, 1024
      %43 = vsyncadd [#allocation6], %s42
      %s44 = sshll.u32 [#allocation5], 4
      %s45 = int_to_ptr.vmem [resolvable:$true] %s44
      %50 = dma.hbm_to_vmem [thread:$0]  %s5, 1024, %s45, [#allocation6], 64, 64, 4
    $region25: #{tpu_custom_call.1} parent=1 // pred_fallthru
      _
    // Predicated region
    $region26: #{tpu_custom_call.1} parent=1 // pred_check
      _
    $region27: #{tpu_custom_call.1} parent=1 // pred_check_branch
      %52 = sbr.rel (0) target = $region29
    $region28: #{tpu_custom_call.1} parent=1 // pred_region
      _
    $region29: #{tpu_custom_call.1} parent=1 // pred_fallthru
      _
    // Predicated region
    $region30: #{tpu_custom_call.1} parent=1 // pred_check
      _
    $region31: #{tpu_custom_call.1} parent=1 // pred_check_branch
      %54 = sbr.rel (0) target = $region33
    $region32: #{tpu_custom_call.1} parent=1 // pred_region
      %s56 = ssub.s32 1024, 1024
      %57 = vsyncadd [#allocation6], %s56
      %s58 = sshll.u32 [#allocation7], 4
      %s59 = int_to_ptr.vmem [resolvable:$true] %s58
      %64 = dma.hbm_to_vmem [thread:$0]  %s7, 1024, %s59, [#allocation6], 64, 64, 4
    $region33: #{tpu_custom_call.1} parent=1 // pred_fallthru
      _
    // Predicated region
    $region34: #{tpu_custom_call.1} parent=1 // pred_check
      _
    $region35: #{tpu_custom_call.1} parent=1 // pred_check_branch
      %66 = sbr.rel (0) target = $region37
    $region36: #{tpu_custom_call.1} parent=1 // pred_region
      _
    $region37: #{tpu_custom_call.1} parent=1 // pred_fallthru
      _
    // Predicated region
    $region38: #{tpu_custom_call.1} parent=1 // pred_check
      _
    $region39: #{tpu_custom_call.1} parent=1 // pred_check_branch
      %68 = sbr.rel (0) target = $region41
    $region40: #{tpu_custom_call.1} parent=1 // pred_region
      _
    $region41: #{tpu_custom_call.1} parent=1 // pred_fallthru
      _
    // Predicated region
    $region42: #{tpu_custom_call.1} parent=1 // pred_check
      _
    $region43: #{tpu_custom_call.1} parent=1 // pred_check_branch
      %70 = sbr.rel (0) target = $region45
    $region44: #{tpu_custom_call.1} parent=1 // pred_region
      _
    $region45: #{tpu_custom_call.1} parent=1 // pred_fallthru
      _
    // Predicated region
    $region46: #{tpu_custom_call.1} parent=1 // pred_check
      _
    $region47: #{tpu_custom_call.1} parent=1 // pred_check_branch
      %72 = sbr.rel (0) target = $region49
    $region48: #{tpu_custom_call.1} parent=1 // pred_region
      %73 = dma.done [#allocation3], 256
    $region49: #{tpu_custom_call.1} parent=1 // pred_fallthru
      _
    // Predicated region
    $region50: #{tpu_custom_call.1} parent=1 // pred_check
      _
    $region51: #{tpu_custom_call.1} parent=1 // pred_check_branch
      %75 = sbr.rel (0) target = $region53
    $region52: #{tpu_custom_call.1} parent=1 // pred_region
      %76 = dma.done [#allocation6], 1024
    $region53: #{tpu_custom_call.1} parent=1 // pred_fallthru
      _
    // Predicated region
    $region54: #{tpu_custom_call.1} parent=1 // pred_check
      _
    $region55: #{tpu_custom_call.1} parent=1 // pred_check_branch
      %78 = sbr.rel (0) target = $region57
    $region56: #{tpu_custom_call.1} parent=1 // pred_region
      %79 = dma.done [#allocation6], 1024
    $region57: #{tpu_custom_call.1} parent=1 // pred_fallthru
      _
    %v81 = vld [vmem:[%s0] sm:$0xf]
    %v82 = vld [vmem:[#allocation2] sm:$0xf]
    %v83 = vld [vmem:[#allocation2 + $0x4] sm:$0xf]
    %v84 = vld [vmem:[#allocation2 + $0x8] sm:$0xf]
    %v85 = vld [vmem:[#allocation2 + $0xc] sm:$0xf]
    %v86 = vld [vmem:[%s2] sm:$0x1]
    %v88 = vlaneseq
    %v89 = vshrl.u32 %v88, 7
    %v90 = vsub.s32 0, %v89
    %v91 = vrot.slane %v86, %v90
    %v97 = vunpack.c.l.b16 %v82
    %v98 = vunpack.c.l.b16 %v83
    %v99 = vunpack.c.l.b16 %v84
    %v100 = vunpack.c.l.b16 %v85
    %v101 = vpack.c.b16 %v98, %v97
    %v102 = vpack.c.b16 %v100, %v99
    %vm105 = vcmask 261120
    %v107 = vsel %vm105, %v81, 0
    %109 = vmatprep.subr.bf16.mxu0 0
    %110 = vmatpush1.bf16.msra.mxu0 0
    %111 = vmatprep.subr.bf16.mxu0 0
    %112 = vmatpush1.bf16.msra.mxu0 0
    %113 = vmatprep.subr.bf16.mxu0 0
    %114 = vmatpush1.bf16.msra.mxu0 0
    %115 = vmatprep.subr.bf16.mxu0 0
    %116 = vmatpush1.bf16.msra.mxu0 0
    %117 = vmatprep.subr.bf16.mxu0 0
    %118 = vmatpush1.bf16.msra.mxu0 0
    %119 = vmatprep.subr.bf16.mxu0 0
    %120 = vmatpush1.bf16.msra.mxu0 0
    %121 = vmatprep.subr.bf16.mxu0 0
    %122 = vmatpush1.bf16.msra.mxu0 %v102
    %123 = vmatprep.subr.bf16.mxu0 0
    %124 = vmatpush1.bf16.msra.mxu0 %v101
    %125 = vmatprep.subr.bf16.mxu0 0
    %126 = vmatpush2.bf16.msra.mxu0 0
    %127 = vmatprep.subr.bf16.mxu0 0
    %128 = vmatpush2.bf16.msra.mxu0 0
    %129 = vmatprep.subr.bf16.mxu0 0
    %130 = vmatpush2.bf16.msra.mxu0 0
    %131 = vmatprep.subr.bf16.mxu0 0
    %132 = vmatpush2.bf16.msra.mxu0 0
    %133 = vmatprep.subr.bf16.mxu0 0
    %134 = vmatpush2.bf16.msra.mxu0 0
    %135 = vmatprep.subr.bf16.mxu0 0
    %136 = vmatpush2.bf16.msra.mxu0 0
    %137 = vmatprep.subr.bf16.mxu0 0
    %138 = vmatpush2.bf16.msra.mxu0 0
    %139 = vmatprep.subr.bf16.mxu0 0
    %140 = vmatpush2.bf16.msra.mxu0 0
    %141 = vmatprep.mubr.bf16.mxu0 0
    %142 = vmatmul.mubr.bf16.gmra.mxu0 %v107
    %v143 = vpop.f32.mrf.mxu0
    %v144 = vadd.f32 %v91, %v143
    %v145 = vpop.f32.mrf.mxu0
    %v146 = vpop.f32.mrf.mxu0
    %v147 = vpop.f32.mrf.mxu0
    %148 = vdwg.mxu0
    %v149 = vmul.f32 %v144, 0.5
    %v150 = vtanh.pop %v149
    %v151 = vmul.f32 %v150, 0.5
    %v152 = vadd.f32 %v151, 0.5
    %v153 = vpack.c.bf16 %v152, %v152
    %v154 = vld [vmem:[%s3] sm:$0xf]
    %v155 = vld [vmem:[%s3 + $0x4] sm:$0xf]
    %v156 = vld [vmem:[%s3 + $0x8] sm:$0xf]
    %v157 = vld [vmem:[%s3 + $0xc] sm:$0xf]
    %v158 = vld [vmem:[%s3 + $0x10] sm:$0xf]
    %v159 = vld [vmem:[%s3 + $0x14] sm:$0xf]
    %v160 = vld [vmem:[%s3 + $0x18] sm:$0xf]
    %v161 = vld [vmem:[%s3 + $0x1c] sm:$0xf]
    %v162 = vld [vmem:[%s3 + $0x20] sm:$0xf]
    %v163 = vld [vmem:[%s3 + $0x24] sm:$0xf]
    %v164 = vld [vmem:[%s3 + $0x28] sm:$0xf]
    %v165 = vld [vmem:[%s3 + $0x2c] sm:$0xf]
    %v166 = vld [vmem:[%s3 + $0x30] sm:$0xf]
    %v167 = vld [vmem:[%s3 + $0x34] sm:$0xf]
    %v168 = vld [vmem:[%s3 + $0x38] sm:$0xf]
    %v169 = vld [vmem:[%s3 + $0x3c] sm:$0xf]
    %v170 = vld [vmem:[%s4] sm:$0x1]
    %v172 = vlaneseq
    %v173 = vshrl.u32 %v172, 7
    %v174 = vsub.s32 0, %v173
    %v175 = vrot.slane %v170, %v174
    %v193 = vunpack.c.l.b16 %v154
    %v194 = vunpack.c.l.b16 %v155
    %v195 = vunpack.c.l.b16 %v156
    %v196 = vunpack.c.l.b16 %v157
    %v197 = vunpack.c.l.b16 %v158
    %v198 = vunpack.c.l.b16 %v159
    %v199 = vunpack.c.l.b16 %v160
    %v200 = vunpack.c.l.b16 %v161
    %v201 = vunpack.c.l.b16 %v162
    %v202 = vunpack.c.l.b16 %v163
    %v203 = vunpack.c.l.b16 %v164
    %v204 = vunpack.c.l.b16 %v165
    %v205 = vunpack.c.l.b16 %v166
    %v206 = vunpack.c.l.b16 %v167
    %v207 = vunpack.c.l.b16 %v168
    %v208 = vunpack.c.l.b16 %v169
    %v209 = vpack.c.b16 %v194, %v193
    %v210 = vpack.c.b16 %v196, %v195
    %v211 = vpack.c.b16 %v198, %v197
    %v212 = vpack.c.b16 %v200, %v199
    %v213 = vpack.c.b16 %v202, %v201
    %v214 = vpack.c.b16 %v204, %v203
    %v215 = vpack.c.b16 %v206, %v205
    %v216 = vpack.c.b16 %v208, %v207
    %225 = vmatprep.subr.bf16.mxu0 0
    %226 = vmatpush1.bf16.msra.mxu0 %v216
    %227 = vmatprep.subr.bf16.mxu0 0
    %228 = vmatpush1.bf16.msra.mxu0 %v215
    %229 = vmatprep.subr.bf16.mxu0 0
    %230 = vmatpush1.bf16.msra.mxu0 %v214
    %231 = vmatprep.subr.bf16.mxu0 0
    %232 = vmatpush1.bf16.msra.mxu0 %v213
    %233 = vmatprep.subr.bf16.mxu0 0
    %234 = vmatpush1.bf16.msra.mxu0 %v212
    %235 = vmatprep.subr.bf16.mxu0 0
    %236 = vmatpush1.bf16.msra.mxu0 %v211
    %237 = vmatprep.subr.bf16.mxu0 0
    %238 = vmatpush1.bf16.msra.mxu0 %v210
    %239 = vmatprep.subr.bf16.mxu0 0
    %240 = vmatpush1.bf16.msra.mxu0 %v209
    %241 = vmatprep.subr.bf16.mxu0 0
    %242 = vmatpush2.bf16.msra.mxu0 0
    %243 = vmatprep.subr.bf16.mxu0 0
    %244 = vmatpush2.bf16.msra.mxu0 0
    %245 = vmatprep.subr.bf16.mxu0 0
    %246 = vmatpush2.bf16.msra.mxu0 0
    %247 = vmatprep.subr.bf16.mxu0 0
    %248 = vmatpush2.bf16.msra.mxu0 0
    %249 = vmatprep.subr.bf16.mxu0 0
    %250 = vmatpush2.bf16.msra.mxu0 0
    %251 = vmatprep.subr.bf16.mxu0 0
    %252 = vmatpush2.bf16.msra.mxu0 0
    %253 = vmatprep.subr.bf16.mxu0 0
    %254 = vmatpush2.bf16.msra.mxu0 0
    %255 = vmatprep.subr.bf16.mxu0 0
    %256 = vmatpush2.bf16.msra.mxu0 0
    %257 = vmatprep.mubr.bf16.mxu0 0
    %258 = vmatmul.mubr.bf16.gmra.mxu0 %v153
    %v259 = vpop.f32.mrf.mxu0
    %v260 = vadd.f32 %v175, %v259
    %v261 = vpop.f32.mrf.mxu0
    %v262 = vpop.f32.mrf.mxu0
    %v263 = vpop.f32.mrf.mxu0
    %264 = vdwg.mxu0
    %v265 = vmul.f32 %v260, 0.5
    %v266 = vtanh.pop %v265
    %v267 = vmul.f32 %v266, 0.5
    %v268 = vadd.f32 %v267, 0.5
    %v269 = vpack.c.bf16 %v268, %v268
    %v270 = vld [vmem:[#allocation5] sm:$0xf]
    %v271 = vld [vmem:[#allocation5 + $0x4] sm:$0xf]
    %v272 = vld [vmem:[#allocation5 + $0x8] sm:$0xf]
    %v273 = vld [vmem:[#allocation5 + $0xc] sm:$0xf]
    %v274 = vld [vmem:[#allocation5 + $0x10] sm:$0xf]
    %v275 = vld [vmem:[#allocation5 + $0x14] sm:$0xf]
    %v276 = vld [vmem:[#allocation5 + $0x18] sm:$0xf]
    %v277 = vld [vmem:[#allocation5 + $0x1c] sm:$0xf]
    %v278 = vld [vmem:[#allocation5 + $0x20] sm:$0xf]
    %v279 = vld [vmem:[#allocation5 + $0x24] sm:$0xf]
    %v280 = vld [vmem:[#allocation5 + $0x28] sm:$0xf]
    %v281 = vld [vmem:[#allocation5 + $0x2c] sm:$0xf]
    %v282 = vld [vmem:[#allocation5 + $0x30] sm:$0xf]
    %v283 = vld [vmem:[#allocation5 + $0x34] sm:$0xf]
    %v284 = vld [vmem:[#allocation5 + $0x38] sm:$0xf]
    %v285 = vld [vmem:[#allocation5 + $0x3c] sm:$0xf]
    %v286 = vld [vmem:[%s6] sm:$0x1]
    %v288 = vlaneseq
    %v289 = vshrl.u32 %v288, 7
    %v290 = vsub.s32 0, %v289
    %v291 = vrot.slane %v286, %v290
    %v309 = vunpack.c.l.b16 %v270
    %v310 = vunpack.c.l.b16 %v271
    %v311 = vunpack.c.l.b16 %v272
    %v312 = vunpack.c.l.b16 %v273
    %v313 = vunpack.c.l.b16 %v274
    %v314 = vunpack.c.l.b16 %v275
    %v315 = vunpack.c.l.b16 %v276
    %v316 = vunpack.c.l.b16 %v277
    %v317 = vunpack.c.l.b16 %v278
    %v318 = vunpack.c.l.b16 %v279
    %v319 = vunpack.c.l.b16 %v280
    %v320 = vunpack.c.l.b16 %v281
    %v321 = vunpack.c.l.b16 %v282
    %v322 = vunpack.c.l.b16 %v283
    %v323 = vunpack.c.l.b16 %v284
    %v324 = vunpack.c.l.b16 %v285
    %v325 = vpack.c.b16 %v310, %v309
    %v326 = vpack.c.b16 %v312, %v311
    %v327 = vpack.c.b16 %v314, %v313
    %v328 = vpack.c.b16 %v316, %v315
    %v329 = vpack.c.b16 %v318, %v317
    %v330 = vpack.c.b16 %v320, %v319
    %v331 = vpack.c.b16 %v322, %v321
    %v332 = vpack.c.b16 %v324, %v323
    %341 = vmatprep.subr.bf16.mxu0 0
    %342 = vmatpush1.bf16.msra.mxu0 %v332
    %343 = vmatprep.subr.bf16.mxu0 0
    %344 = vmatpush1.bf16.msra.mxu0 %v331
    %345 = vmatprep.subr.bf16.mxu0 0
    %346 = vmatpush1.bf16.msra.mxu0 %v330
    %347 = vmatprep.subr.bf16.mxu0 0
    %348 = vmatpush1.bf16.msra.mxu0 %v329
    %349 = vmatprep.subr.bf16.mxu0 0
    %350 = vmatpush1.bf16.msra.mxu0 %v328
    %351 = vmatprep.subr.bf16.mxu0 0
    %352 = vmatpush1.bf16.msra.mxu0 %v327
    %353 = vmatprep.subr.bf16.mxu0 0
    %354 = vmatpush1.bf16.msra.mxu0 %v326
    %355 = vmatprep.subr.bf16.mxu0 0
    %356 = vmatpush1.bf16.msra.mxu0 %v325
    %357 = vmatprep.subr.bf16.mxu0 0
    %358 = vmatpush2.bf16.msra.mxu0 0
    %359 = vmatprep.subr.bf16.mxu0 0
    %360 = vmatpush2.bf16.msra.mxu0 0
    %361 = vmatprep.subr.bf16.mxu0 0
    %362 = vmatpush2.bf16.msra.mxu0 0
    %363 = vmatprep.subr.bf16.mxu0 0
    %364 = vmatpush2.bf16.msra.mxu0 0
    %365 = vmatprep.subr.bf16.mxu0 0
    %366 = vmatpush2.bf16.msra.mxu0 0
    %367 = vmatprep.subr.bf16.mxu0 0
    %368 = vmatpush2.bf16.msra.mxu0 0
    %369 = vmatprep.subr.bf16.mxu0 0
    %370 = vmatpush2.bf16.msra.mxu0 0
    %371 = vmatprep.subr.bf16.mxu0 0
    %372 = vmatpush2.bf16.msra.mxu0 0
    %373 = vmatprep.mubr.bf16.mxu0 0
    %374 = vmatmul.mubr.bf16.gmra.mxu0 %v269
    %v375 = vpop.f32.mrf.mxu0
    %v376 = vadd.f32 %v291, %v375
    %v377 = vpop.f32.mrf.mxu0
    %v378 = vpop.f32.mrf.mxu0
    %v379 = vpop.f32.mrf.mxu0
    %380 = vdwg.mxu0
    %v381 = vmul.f32 %v376, 0.5
    %v382 = vtanh.pop %v381
    %v383 = vmul.f32 %v382, 0.5
    %v384 = vadd.f32 %v383, 0.5
    %v385 = vpack.c.bf16 %v384, %v384
    %v386 = vld [vmem:[#allocation7] sm:$0xf]
    %v387 = vld [vmem:[#allocation7 + $0x4] sm:$0xf]
    %v388 = vld [vmem:[#allocation7 + $0x8] sm:$0xf]
    %v389 = vld [vmem:[#allocation7 + $0xc] sm:$0xf]
    %v390 = vld [vmem:[#allocation7 + $0x10] sm:$0xf]
    %v391 = vld [vmem:[#allocation7 + $0x14] sm:$0xf]
    %v392 = vld [vmem:[#allocation7 + $0x18] sm:$0xf]
    %v393 = vld [vmem:[#allocation7 + $0x1c] sm:$0xf]
    %v394 = vld [vmem:[#allocation7 + $0x20] sm:$0xf]
    %v395 = vld [vmem:[#allocation7 + $0x24] sm:$0xf]
    %v396 = vld [vmem:[#allocation7 + $0x28] sm:$0xf]
    %v397 = vld [vmem:[#allocation7 + $0x2c] sm:$0xf]
    %v398 = vld [vmem:[#allocation7 + $0x30] sm:$0xf]
    %v399 = vld [vmem:[#allocation7 + $0x34] sm:$0xf]
    %v400 = vld [vmem:[#allocation7 + $0x38] sm:$0xf]
    %v401 = vld [vmem:[#allocation7 + $0x3c] sm:$0xf]
    %v402 = vld [vmem:[%s8] sm:$0x1]
    %v404 = vlaneseq
    %v405 = vshrl.u32 %v404, 7
    %v406 = vsub.s32 0, %v405
    %v407 = vrot.slane %v402, %v406
    %v425 = vunpack.c.l.b16 %v386
    %v426 = vunpack.c.l.b16 %v387
    %v427 = vunpack.c.l.b16 %v388
    %v428 = vunpack.c.l.b16 %v389
    %v429 = vunpack.c.l.b16 %v390
    %v430 = vunpack.c.l.b16 %v391
    %v431 = vunpack.c.l.b16 %v392
    %v432 = vunpack.c.l.b16 %v393
    %v433 = vunpack.c.l.b16 %v394
    %v434 = vunpack.c.l.b16 %v395
    %v435 = vunpack.c.l.b16 %v396
    %v436 = vunpack.c.l.b16 %v397
    %v437 = vunpack.c.l.b16 %v398
    %v438 = vunpack.c.l.b16 %v399
    %v439 = vunpack.c.l.b16 %v400
    %v440 = vunpack.c.l.b16 %v401
    %v441 = vpack.c.b16 %v426, %v425
    %v442 = vpack.c.b16 %v428, %v427
    %v443 = vpack.c.b16 %v430, %v429
    %v444 = vpack.c.b16 %v432, %v431
    %v445 = vpack.c.b16 %v434, %v433
    %v446 = vpack.c.b16 %v436, %v435
    %v447 = vpack.c.b16 %v438, %v437
    %v448 = vpack.c.b16 %v440, %v439
    %457 = vmatprep.subr.bf16.mxu0 0
    %458 = vmatpush1.bf16.msra.mxu0 %v448
    %459 = vmatprep.subr.bf16.mxu0 0
    %460 = vmatpush1.bf16.msra.mxu0 %v447
    %461 = vmatprep.subr.bf16.mxu0 0
    %462 = vmatpush1.bf16.msra.mxu0 %v446
    %463 = vmatprep.subr.bf16.mxu0 0
    %464 = vmatpush1.bf16.msra.mxu0 %v445
    %465 = vmatprep.subr.bf16.mxu0 0
    %466 = vmatpush1.bf16.msra.mxu0 %v444
    %467 = vmatprep.subr.bf16.mxu0 0
    %468 = vmatpush1.bf16.msra.mxu0 %v443
    %469 = vmatprep.subr.bf16.mxu0 0
    %470 = vmatpush1.bf16.msra.mxu0 %v442
    %471 = vmatprep.subr.bf16.mxu0 0
    %472 = vmatpush1.bf16.msra.mxu0 %v441
    %473 = vmatprep.subr.bf16.mxu0 0
    %474 = vmatpush2.bf16.msra.mxu0 0
    %475 = vmatprep.subr.bf16.mxu0 0
    %476 = vmatpush2.bf16.msra.mxu0 0
    %477 = vmatprep.subr.bf16.mxu0 0
    %478 = vmatpush2.bf16.msra.mxu0 0
    %479 = vmatprep.subr.bf16.mxu0 0
    %480 = vmatpush2.bf16.msra.mxu0 0
    %481 = vmatprep.subr.bf16.mxu0 0
    %482 = vmatpush2.bf16.msra.mxu0 0
    %483 = vmatprep.subr.bf16.mxu0 0
    %484 = vmatpush2.bf16.msra.mxu0 0
    %485 = vmatprep.subr.bf16.mxu0 0
    %486 = vmatpush2.bf16.msra.mxu0 0
    %487 = vmatprep.subr.bf16.mxu0 0
    %488 = vmatpush2.bf16.msra.mxu0 0
    %489 = vmatprep.mubr.bf16.mxu0 0
    %490 = vmatmul.mubr.bf16.gmra.mxu0 %v385
    %v491 = vpop.f32.mrf.mxu0
    %v492 = vadd.f32 %v407, %v491
    %v493 = vpop.f32.mrf.mxu0
    %v494 = vpop.f32.mrf.mxu0
    %v495 = vpop.f32.mrf.mxu0
    %496 = vdwg.mxu0
    %v497 = vmul.f32 %v492, 0.5
    %v498 = vtanh.pop %v497
    %v499 = vmul.f32 %v498, 0.5
    %v500 = vadd.f32 %v499, 0.5
    %v501 = vpack.c.bf16 %v500, %v500
    %v502 = vld [vmem:[%s9] sm:$0xf]
    %v503 = vld [vmem:[%s9 + $0x4] sm:$0xf]
    %v504 = vld [vmem:[%s9 + $0x8] sm:$0xf]
    %v505 = vld [vmem:[%s9 + $0xc] sm:$0xf]
    %v506 = vld [vmem:[%s9 + $0x10] sm:$0xf]
    %v507 = vld [vmem:[%s9 + $0x14] sm:$0xf]
    %v508 = vld [vmem:[%s9 + $0x18] sm:$0xf]
    %v509 = vld [vmem:[%s9 + $0x1c] sm:$0xf]
    %v510 = vld [vmem:[%s9 + $0x20] sm:$0xf]
    %v511 = vld [vmem:[%s9 + $0x24] sm:$0xf]
    %v512 = vld [vmem:[%s9 + $0x28] sm:$0xf]
    %v513 = vld [vmem:[%s9 + $0x2c] sm:$0xf]
    %v514 = vld [vmem:[%s9 + $0x30] sm:$0xf]
    %v515 = vld [vmem:[%s9 + $0x34] sm:$0xf]
    %v516 = vld [vmem:[%s9 + $0x38] sm:$0xf]
    %v517 = vld [vmem:[%s9 + $0x3c] sm:$0xf]
    %v518 = vld [vmem:[%s10] sm:$0x1]
    %v520 = vlaneseq
    %v521 = vshrl.u32 %v520, 7
    %v522 = vsub.s32 0, %v521
    %v523 = vrot.slane %v518, %v522
    %v541 = vunpack.c.l.b16 %v502
    %v542 = vunpack.c.l.b16 %v503
    %v543 = vunpack.c.l.b16 %v504
    %v544 = vunpack.c.l.b16 %v505
    %v545 = vunpack.c.l.b16 %v506
    %v546 = vunpack.c.l.b16 %v507
    %v547 = vunpack.c.l.b16 %v508
    %v548 = vunpack.c.l.b16 %v509
    %v549 = vunpack.c.l.b16 %v510
    %v550 = vunpack.c.l.b16 %v511
    %v551 = vunpack.c.l.b16 %v512
    %v552 = vunpack.c.l.b16 %v513
    %v553 = vunpack.c.l.b16 %v514
    %v554 = vunpack.c.l.b16 %v515
    %v555 = vunpack.c.l.b16 %v516
    %v556 = vunpack.c.l.b16 %v517
    %v557 = vpack.c.b16 %v542, %v541
    %v558 = vpack.c.b16 %v544, %v543
    %v559 = vpack.c.b16 %v546, %v545
    %v560 = vpack.c.b16 %v548, %v547
    %v561 = vpack.c.b16 %v550, %v549
    %v562 = vpack.c.b16 %v552, %v551
    %v563 = vpack.c.b16 %v554, %v553
    %v564 = vpack.c.b16 %v556, %v555
    %573 = vmatprep.subr.bf16.mxu0 0
    %574 = vmatpush1.bf16.msra.mxu0 %v564
    %575 = vmatprep.subr.bf16.mxu0 0
    %576 = vmatpush1.bf16.msra.mxu0 %v563
    %577 = vmatprep.subr.bf16.mxu0 0
    %578 = vmatpush1.bf16.msra.mxu0 %v562
    %579 = vmatprep.subr.bf16.mxu0 0
    %580 = vmatpush1.bf16.msra.mxu0 %v561
    %581 = vmatprep.subr.bf16.mxu0 0
    %582 = vmatpush1.bf16.msra.mxu0 %v560
    %583 = vmatprep.subr.bf16.mxu0 0
    %584 = vmatpush1.bf16.msra.mxu0 %v559
    %585 = vmatprep.subr.bf16.mxu0 0
    %586 = vmatpush1.bf16.msra.mxu0 %v558
    %587 = vmatprep.subr.bf16.mxu0 0
    %588 = vmatpush1.bf16.msra.mxu0 %v557
    %589 = vmatprep.subr.bf16.mxu0 0
    %590 = vmatpush2.bf16.msra.mxu0 0
    %591 = vmatprep.subr.bf16.mxu0 0
    %592 = vmatpush2.bf16.msra.mxu0 0
    %593 = vmatprep.subr.bf16.mxu0 0
    %594 = vmatpush2.bf16.msra.mxu0 0
    %595 = vmatprep.subr.bf16.mxu0 0
    %596 = vmatpush2.bf16.msra.mxu0 0
    %597 = vmatprep.subr.bf16.mxu0 0
    %598 = vmatpush2.bf16.msra.mxu0 0
    %599 = vmatprep.subr.bf16.mxu0 0
    %600 = vmatpush2.bf16.msra.mxu0 0
    %601 = vmatprep.subr.bf16.mxu0 0
    %602 = vmatpush2.bf16.msra.mxu0 0
    %603 = vmatprep.subr.bf16.mxu0 0
    %604 = vmatpush2.bf16.msra.mxu0 0
    %605 = vmatprep.mubr.bf16.mxu0 0
    %606 = vmatmul.mubr.bf16.gmra.mxu0 %v501
    %v607 = vpop.f32.mrf.mxu0
    %v608 = vadd.f32 %v523, %v607
    %v609 = vpop.f32.mrf.mxu0
    %v610 = vpop.f32.mrf.mxu0
    %v611 = vpop.f32.mrf.mxu0
    %612 = vdwg.mxu0
    %vm613 = vcmask 64512
    %614 = vst.msk [vmem:[#allocation8] sm:$0xff] %vm613, %v608
    // Predicated region
    $region58: #{tpu_custom_call.1} parent=1 // pred_check
      _
    $region59: #{tpu_custom_call.1} parent=1 // pred_check_branch
      %616 = sbr.rel (0) target = $region61
    $region60: #{tpu_custom_call.1} parent=1 // pred_region
      %s618 = ssub.s32 128, 128
      %619 = vsyncadd [#allocation4], %s618
      %s621 = sshll.u32 [#allocation8], 4
      %s622 = int_to_ptr.vmem [resolvable:$true] %s621
      %624 = dma.vmem_to_hbm [thread:$0]  %s622, 128, %s11, [#allocation4]
    $region61: #{tpu_custom_call.1} parent=1 // pred_fallthru
      _
    // Predicated region
    $region62: #{tpu_custom_call.1} parent=1 // pred_check
      _
    $region63: #{tpu_custom_call.1} parent=1 // pred_check_branch
      %626 = sbr.rel (0) target = $region65
    $region64: #{tpu_custom_call.1} parent=1 // pred_region
      %627 = dma.done [#allocation4], 128
    $region65: #{tpu_custom_call.1} parent=1 // pred_fallthru
      _
    %628 = vsyncpa [#allocation3], 1
    %629 = vsyncpa [#allocation6], 1
    %630 = vsyncpa [#allocation4], 1

</llo_original>
